<compile_context>
chip_gen: v6e
topology: v6e:2x2x1
jax: 0.10.0
libtpu: 0.0.40
codegen_flags: <defaults>
</compile_context>

<pallas_src>
import numpy as np
import jax
import jax.numpy as jnp
from jax.experimental import pallas as pl
from jax.experimental.pallas import tpu as pltpu

LANE = 128


# ----------------------------------------------------------------------------
# Schedule buffers (float64 math, registered as float32 — same as the module)
# ----------------------------------------------------------------------------
def sigmoid_beta_schedule1(timesteps, start=-3, end=3, tau=0.5):
    steps = timesteps + 1
    t = np.linspace(0, timesteps, steps, dtype=np.float64) / timesteps
    sig = lambda z: 1.0 / (1.0 + np.exp(-z))
    v_start = sig(start / tau)
    v_end = sig(end / tau)
    ac = (-sig((t * (end - start) + start) / tau) + v_end) / (v_end - v_start)
    ac = ac / ac[0]
    betas = 1.0 - ac[1:] / ac[:-1]
    return np.clip(betas, 0.0, 0.999)


def make_diffusion_buffers(timesteps):
    betas = sigmoid_beta_schedule1(timesteps)
    alphas = 1.0 - betas
    alphas_cumprod = np.cumprod(alphas, axis=0)
    snr = alphas_cumprod / (1.0 - alphas_cumprod)
    return {
        "sqrt_alphas_cumprod": jnp.asarray(np.sqrt(alphas_cumprod), jnp.float32),
        "sqrt_one_minus_alphas_cumprod": jnp.asarray(
            np.sqrt(1.0 - alphas_cumprod), jnp.float32
        ),
        # objective == 'pred_v'  ->  loss_weight = snr / (snr + 1)
        "loss_weight": jnp.asarray(snr / (snr + 1.0), jnp.float32),
    }


# ----------------------------------------------------------------------------
# Pallas kernel: per-batch diffusion-loss partial sums, SMEM per-batch scalars
# ----------------------------------------------------------------------------
def make_p_losses_kernel(C, tile_hw, use_mxu):
    fold_lanes = (tile_hw % LANE == 0) and (tile_hw >= LANE)

    def p_losses_kernel(coef_ref, x0_ref, nz_ref, w_ref, bias_ref, gamma_ref, out_ref):
        b = pl.program_id(0)
        j = pl.program_id(1)

        # out_ref is the resident per-batch (R, 128) accumulator block
        @pl.when(j == 0)
        def _():
            out_ref[...] = jnp.zeros_like(out_ref)

        # per-batch scalars from SMEM (replaces the old lane-dense coef stream)
        a = coef_ref[b, 0]    # sqrt_alphas_cumprod[t_b]
        s = coef_ref[b, 1]    # sqrt_one_minus_alphas_cumprod[t_b]
        tn = coef_ref[b, 2]   # normalized timestep t_b / T

        x0 = x0_ref[...]      # (C, tile_hw)
        nz = nz_ref[...]      # (C, tile_hw)

        # q_sample: x_t = sqrt(ac[t]) * x0 + sqrt(1 - ac[t]) * noise
        x_t = a * x0 + s * nz
        # pred_v target: v = sqrt(ac[t]) * noise - sqrt(1 - ac[t]) * x0
        target = a * nz - s * x0

        # synthetic denoiser: channel mix (1x1 conv) + bias + time shift
        if use_mxu:
            mix = jnp.dot(w_ref[...], x_t, preferred_element_type=jnp.float32)
        else:
            # small C: VPU broadcast-FMAs instead of a near-empty MXU matmul
            w = w_ref[...]
            mix = w[:, 0:1] * x_t[0:1, :]
            for c in range(1, C):
                mix = mix + w[:, c:c + 1] * x_t[c:c + 1, :]
        model_out = mix + bias_ref[...] + tn * gamma_ref[...]

        diff = model_out - target
        sq = diff * diff                                   # (C, tile_hw)

        if fold_lanes:
            # lane-group fold with plain VALU adds (multi-accumulator to keep the
            # dependency chain short); single store into the resident block.
            nk = tile_hw // LANE
            n_acc = min(8, nk)
            accs = [sq[:, i * LANE:(i + 1) * LANE] for i in range(n_acc)]
            for k in range(n_acc, nk):
                accs[k % n_acc] = accs[k % n_acc] + sq[:, k * LANE:(k + 1) * LANE]
            folded = accs[0]
            for i in range(1, n_acc):
                folded = folded + accs[i]
            out_ref[0:C, :] = out_ref[0:C, :] + folded     # (C, 128)
        else:
            # ragged spatial extent (< 128 lanes): single XLU lane reduce
            col = jnp.sum(sq, axis=1, keepdims=True)       # (C, 1)
            out_ref[0:C, 0:1] = out_ref[0:C, 0:1] + col

    return p_losses_kernel


def gaussian_diffusion_forward(img, t, noise, buffers, w, bias, gamma, num_timesteps):
    """Returns the scalar training loss of GaussianDiffusion.forward."""
    B, C, H, W = img.shape
    HW = H * W

    # normalize == identity (auto_normalize=False); free reshape, NO transpose
    x0 = img.reshape(B, C, HW).astype(jnp.float32)
    nz = noise.reshape(B, C, HW).astype(jnp.float32)

    # per-batch scalar table for SMEM: [sqrt_ac[t], sqrt_1mac[t], t/T]
    a = buffers["sqrt_alphas_cumprod"][t]
    s = buffers["sqrt_one_minus_alphas_cumprod"][t]
    tn = t.astype(jnp.float32) / float(num_timesteps)
    coefs = jnp.stack([a, s, tn], axis=1).astype(jnp.float32)      # (B, 3)

    # VMEM-aware spatial tile that divides HW exactly (no jnp.pad copies)
    try:
        vmem_cap = int(pltpu.get_tpu_info().vmem_capacity_bytes)
    except Exception:
        vmem_cap = 64 * 1024 * 1024          # conservative (v7x-sized) fallback
    budget = min(vmem_cap // 4, 32 * 1024 * 1024)
    vmem_limit = min(vmem_cap // 2, 64 * 1024 * 1024)

    if HW % LANE != 0:
        tile_hw = HW                          # single (full-row) tile per batch
    else:
        # 2 inputs x 2 pipeline buffers + ~8 f32 temporaries per lane column
        per_col_bytes = (2 * 2 + 8) * C * 4
        max_cols = max(LANE, min(32768, budget // per_col_bytes))
        nk = HW // LANE
        tile_hw = LANE
        for d in range(1, nk + 1):
            if nk % d == 0 and d * LANE <= max_cols:
                tile_hw = d * LANE
    nj = HW // tile_hw

    R = max(8, ((C + 7) // 8) * 8)            # sublane-padded accumulator rows
    use_mxu = C >= 32
    kernel = make_p_losses_kernel(C, tile_hw, use_mxu)

    partial = pl.pallas_call(
        kernel,
        out_shape=jax.ShapeDtypeStruct((B, R, LANE), jnp.float32),
        grid_spec=pltpu.PrefetchScalarGridSpec(
            num_scalar_prefetch=0,
            grid=(B, nj),
            in_specs=[
                pl.BlockSpec(memory_space=pltpu.MemorySpace.SMEM),          # (B,3) coefs
                pl.BlockSpec((None, C, tile_hw), lambda b, j: (b, 0, j)),   # x_start
                pl.BlockSpec((None, C, tile_hw), lambda b, j: (b, 0, j)),   # noise
                pl.BlockSpec((C, C), lambda b, j: (0, 0)),                  # denoiser W
                pl.BlockSpec((C, 1), lambda b, j: (0, 0)),                  # denoiser bias
                pl.BlockSpec((C, 1), lambda b, j: (0, 0)),                  # time shift
            ],
            out_specs=pl.BlockSpec((None, R, LANE), lambda b, j: (b, 0, 0)),
        ),
        compiler_params=pltpu.CompilerParams(
            dimension_semantics=("parallel", "arbitrary"),  # batch parallel (2 TCs on v7x)
            vmem_limit_bytes=vmem_limit,
        ),
    )(coefs, x0, nz, w, bias, gamma)

    # tiny finalize in JAX: per-batch mean over (c,h,w), SNR weight, batch mean
    per_b_sum = jnp.sum(partial.reshape(B, -1), axis=1)            # (B,)
    lw = buffers["loss_weight"][t]
    return jnp.mean(per_b_sum * lw) / float(C * HW)


# ----------------------------------------------------------------------------
# Pure-JAX reference for correctness check
# ----------------------------------------------------------------------------
def reference_loss(img, t, noise, buffers, w, bias, gamma, num_timesteps):
    B, C, H, W = img.shape
    a = buffers["sqrt_alphas_cumprod"][t][:, None, None, None]
    s = buffers["sqrt_one_minus_alphas_cumprod"][t][:, None, None, None]
    lw = buffers["loss_weight"][t]
    tn = t.astype(jnp.float32) / float(num_timesteps)

    x_t = a * img + s * noise
    xf = x_t.reshape(B, C, -1)
    mo = (
        jnp.einsum("oc,bcp->bop", w, xf)
        + bias[None]
        + tn[:, None, None] * gamma[None]
    )
    v = (a * noise - s * img).reshape(B, C, -1)
    per_b = jnp.mean((mo - v) ** 2, axis=(1, 2)) * lw
    return jnp.mean(per_b)


# ----------------------------------------------------------------------------
if __name__ == "__main__":
    B, C, H = 2, 4, 16           # batch, channels, image_size
    T = 100                      # num_timesteps

    buffers = make_diffusion_buffers(T)

    key = jax.random.PRNGKey(0)
    kw, kb, kg, kimg, kt, kn = jax.random.split(key, 6)

    # deterministic synthetic denoiser parameters
    w = jax.random.normal(kw, (C, C), jnp.float32) * 0.1
    bias = jax.random.normal(kb, (C, 1), jnp.float32) * 0.01
    gamma = jax.random.normal(kg, (C, 1), jnp.float32) * 0.01

    # forward() inputs: img (NCHW), t ~ randint(0, T, (B,)), noise ~ N(0, 1)
    img = jax.random.normal(kimg, (B, C, H, H), jnp.float32)
    t = jax.random.randint(kt, (B,), 0, T, dtype=jnp.int32)
    noise = jax.random.normal(kn, (B, C, H, H), jnp.float32)

    loss = gaussian_diffusion_forward(img, t, noise, buffers, w, bias, gamma, T)
    loss = jax.block_until_ready(loss)

    ref = jax.block_until_ready(
        reference_loss(img, t, noise, buffers, w, bias, gamma, T)
    )
    assert np.isfinite(float(loss))
    np.testing.assert_allclose(np.asarray(loss), np.asarray(ref), rtol=2e-5, atol=1e-6)

    print("KERNEL_OK")
</pallas_src>

<mosaic_0001>
module attributes {stable_mosaic.version = 11 : i64} {
  func.func @p_losses_kernel(%arg0: i32, %arg1: i32, %arg2: memref<2x3xf32, #tpu.memory_space<smem>>, %arg3: memref<1x4x256xf32, #tpu.memory_space<vmem>>, %arg4: memref<1x4x256xf32, #tpu.memory_space<vmem>>, %arg5: memref<4x4xf32, #tpu.memory_space<vmem>>, %arg6: memref<4x1xf32, #tpu.memory_space<vmem>>, %arg7: memref<4x1xf32, #tpu.memory_space<vmem>>, %arg8: memref<1x8x128xf32, #tpu.memory_space<vmem>>) attributes {dimension_semantics = [#tpu.dimension_semantics<parallel>, #tpu.dimension_semantics<arbitrary>], iteration_bounds = array<i64: 2, 1>, scalar_prefetch = 0 : i64, scratch_operands = 0 : i64, tpu.core_type = #tpu.core_type<tc>, window_params = [{transform_indices = @transform_0, window_bounds = array<i64: 2, 3>}, {transform_indices = @transform_1, window_bounds = array<i64: 1, 4, 256>}, {transform_indices = @transform_2, window_bounds = array<i64: 1, 4, 256>}, {pipeline_mode = #tpu.pipeline_mode<synchronous>, transform_indices = @transform_3, window_bounds = array<i64: 4, 4>}, {pipeline_mode = #tpu.pipeline_mode<synchronous>, transform_indices = @transform_4, window_bounds = array<i64: 4, 1>}, {pipeline_mode = #tpu.pipeline_mode<synchronous>, transform_indices = @transform_5, window_bounds = array<i64: 4, 1>}, {transform_indices = @transform_6, window_bounds = array<i64: 1, 8, 128>}]} {
    %c0_i32 = arith.constant 0 : i32
    %0 = arith.cmpi eq, %arg1, %c0_i32 : i32
    %1 = arith.extui %0 : i1 to i32
    %c0_i32_0 = arith.constant 0 : i32
    %2 = arith.cmpi ne, %1, %c0_i32_0 : i32
    scf.if %2 {
      %cst = arith.constant 0.000000e+00 : f32
      %66 = vector.broadcast %cst : f32 to vector<8x128xf32>
      %c0_19 = arith.constant 0 : index
      %c0_20 = arith.constant 0 : index
      %c0_21 = arith.constant 0 : index
      %67 = vector.load %arg8[%c0_19, %c0_20, %c0_21] : memref<1x8x128xf32, #tpu.memory_space<vmem>>, vector<1x8x128xf32>
      %68 = vector.shape_cast %67 : vector<1x8x128xf32> to vector<8x128xf32>
      %69 = vector.shape_cast %66 : vector<8x128xf32> to vector<1x8x128xf32>
      tpu.vector_store %arg8[%c0_19, %c0_20, %c0_21], %69 {strides = array<i32>} : memref<1x8x128xf32, #tpu.memory_space<vmem>>, vector<1x8x128xf32>,
    } else {
    }
    %3 = arith.index_cast %arg0 : i32 to index
    %c0 = arith.constant 0 : index
    %4 = memref.load %arg2[%3, %c0] : memref<2x3xf32, #tpu.memory_space<smem>>
    %5 = arith.index_cast %arg0 : i32 to index
    %c1 = arith.constant 1 : index
    %6 = memref.load %arg2[%5, %c1] : memref<2x3xf32, #tpu.memory_space<smem>>
    %7 = arith.index_cast %arg0 : i32 to index
    %c2 = arith.constant 2 : index
    %8 = memref.load %arg2[%7, %c2] : memref<2x3xf32, #tpu.memory_space<smem>>
    %c0_1 = arith.constant 0 : index
    %c0_2 = arith.constant 0 : index
    %c0_3 = arith.constant 0 : index
    %9 = vector.load %arg3[%c0_1, %c0_2, %c0_3] : memref<1x4x256xf32, #tpu.memory_space<vmem>>, vector<1x4x256xf32>
    %10 = vector.shape_cast %9 : vector<1x4x256xf32> to vector<4x256xf32>
    %c0_4 = arith.constant 0 : index
    %c0_5 = arith.constant 0 : index
    %c0_6 = arith.constant 0 : index
    %11 = vector.load %arg4[%c0_4, %c0_5, %c0_6] : memref<1x4x256xf32, #tpu.memory_space<vmem>>, vector<1x4x256xf32>
    %12 = vector.shape_cast %11 : vector<1x4x256xf32> to vector<4x256xf32>
    %13 = vector.broadcast %4 : f32 to vector<4x256xf32>
    %14 = arith.mulf %13, %10 : vector<4x256xf32>
    %15 = vector.broadcast %6 : f32 to vector<4x256xf32>
    %16 = arith.mulf %15, %12 : vector<4x256xf32>
    %17 = arith.addf %14, %16 : vector<4x256xf32>
    %18 = vector.broadcast %4 : f32 to vector<4x256xf32>
    %19 = arith.mulf %18, %12 : vector<4x256xf32>
    %20 = vector.broadcast %6 : f32 to vector<4x256xf32>
    %21 = arith.mulf %20, %10 : vector<4x256xf32>
    %22 = arith.subf %19, %21 : vector<4x256xf32>
    %c0_7 = arith.constant 0 : index
    %c0_8 = arith.constant 0 : index
    %23 = vector.load %arg5[%c0_7, %c0_8] : memref<4x4xf32, #tpu.memory_space<vmem>>, vector<4x4xf32>
    %24 = vector.extract_strided_slice %23 {offsets = [0, 0], sizes = [4, 1], strides = [1, 1]} : vector<4x4xf32> to vector<4x1xf32>
    %25 = vector.extract_strided_slice %17 {offsets = [0, 0], sizes = [1, 256], strides = [1, 1]} : vector<4x256xf32> to vector<1x256xf32>
    %26 = vector.broadcast %24 : vector<4x1xf32> to vector<4x256xf32>
    %27 = vector.broadcast %25 : vector<1x256xf32> to vector<4x256xf32>
    %28 = arith.mulf %26, %27 : vector<4x256xf32>
    %29 = vector.extract_strided_slice %23 {offsets = [0, 1], sizes = [4, 1], strides = [1, 1]} : vector<4x4xf32> to vector<4x1xf32>
    %30 = vector.extract_strided_slice %17 {offsets = [1, 0], sizes = [1, 256], strides = [1, 1]} : vector<4x256xf32> to vector<1x256xf32>
    %31 = vector.broadcast %29 : vector<4x1xf32> to vector<4x256xf32>
    %32 = vector.broadcast %30 : vector<1x256xf32> to vector<4x256xf32>
    %33 = arith.mulf %31, %32 : vector<4x256xf32>
    %34 = arith.addf %28, %33 : vector<4x256xf32>
    %35 = vector.extract_strided_slice %23 {offsets = [0, 2], sizes = [4, 1], strides = [1, 1]} : vector<4x4xf32> to vector<4x1xf32>
    %36 = vector.extract_strided_slice %17 {offsets = [2, 0], sizes = [1, 256], strides = [1, 1]} : vector<4x256xf32> to vector<1x256xf32>
    %37 = vector.broadcast %35 : vector<4x1xf32> to vector<4x256xf32>
    %38 = vector.broadcast %36 : vector<1x256xf32> to vector<4x256xf32>
    %39 = arith.mulf %37, %38 : vector<4x256xf32>
    %40 = arith.addf %34, %39 : vector<4x256xf32>
    %41 = vector.extract_strided_slice %23 {offsets = [0, 3], sizes = [4, 1], strides = [1, 1]} : vector<4x4xf32> to vector<4x1xf32>
    %42 = vector.extract_strided_slice %17 {offsets = [3, 0], sizes = [1, 256], strides = [1, 1]} : vector<4x256xf32> to vector<1x256xf32>
    %43 = vector.broadcast %41 : vector<4x1xf32> to vector<4x256xf32>
    %44 = vector.broadcast %42 : vector<1x256xf32> to vector<4x256xf32>
    %45 = arith.mulf %43, %44 : vector<4x256xf32>
    %46 = arith.addf %40, %45 : vector<4x256xf32>
    %c0_9 = arith.constant 0 : index
    %c0_10 = arith.constant 0 : index
    %47 = vector.load %arg6[%c0_9, %c0_10] : memref<4x1xf32, #tpu.memory_space<vmem>>, vector<4x1xf32>
    %48 = vector.broadcast %47 : vector<4x1xf32> to vector<4x256xf32>
    %49 = arith.addf %46, %48 : vector<4x256xf32>
    %c0_11 = arith.constant 0 : index
    %c0_12 = arith.constant 0 : index
    %50 = vector.load %arg7[%c0_11, %c0_12] : memref<4x1xf32, #tpu.memory_space<vmem>>, vector<4x1xf32>
    %51 = vector.broadcast %8 : f32 to vector<4x1xf32>
    %52 = arith.mulf %51, %50 : vector<4x1xf32>
    %53 = vector.broadcast %52 : vector<4x1xf32> to vector<4x256xf32>
    %54 = arith.addf %49, %53 : vector<4x256xf32>
    %55 = arith.subf %54, %22 : vector<4x256xf32>
    %56 = arith.mulf %55, %55 : vector<4x256xf32>
    %57 = vector.extract_strided_slice %56 {offsets = [0, 0], sizes = [4, 128], strides = [1, 1]} : vector<4x256xf32> to vector<4x128xf32>
    %58 = vector.extract_strided_slice %56 {offsets = [0, 128], sizes = [4, 128], strides = [1, 1]} : vector<4x256xf32> to vector<4x128xf32>
    %59 = arith.addf %57, %58 : vector<4x128xf32>
    %c0_13 = arith.constant 0 : index
    %c0_14 = arith.constant 0 : index
    %c0_15 = arith.constant 0 : index
    %60 = vector.load %arg8[%c0_13, %c0_14, %c0_15] : memref<1x8x128xf32, #tpu.memory_space<vmem>>, vector<1x4x128xf32>
    %61 = vector.shape_cast %60 : vector<1x4x128xf32> to vector<4x128xf32>
    %62 = arith.addf %61, %59 : vector<4x128xf32>
    %c0_16 = arith.constant 0 : index
    %c0_17 = arith.constant 0 : index
    %c0_18 = arith.constant 0 : index
    %63 = vector.load %arg8[%c0_16, %c0_17, %c0_18] : memref<1x8x128xf32, #tpu.memory_space<vmem>>, vector<1x4x128xf32>
    %64 = vector.shape_cast %63 : vector<1x4x128xf32> to vector<4x128xf32>
    %65 = vector.shape_cast %62 : vector<4x128xf32> to vector<1x4x128xf32>
    tpu.vector_store %arg8[%c0_16, %c0_17, %c0_18], %65 {strides = array<i32>} : memref<1x8x128xf32, #tpu.memory_space<vmem>>, vector<1x4x128xf32>,
    return
  }
  func.func @transform_0(%arg0: i32, %arg1: i32) -> (i32, i32) {
    %c0_i32 = arith.constant 0 : i32
    %c0_i32_0 = arith.constant 0 : i32
    %c0_i32_1 = arith.constant 0 : i32
    return %c0_i32, %c0_i32_0 : i32, i32
  }
  func.func @transform_1(%arg0: i32, %arg1: i32) -> (i32, i32, i32) {
    %c0_i32 = arith.constant 0 : i32
    %c0_i32_0 = arith.constant 0 : i32
    return %arg0, %c0_i32, %arg1 : i32, i32, i32
  }
  func.func @transform_2(%arg0: i32, %arg1: i32) -> (i32, i32, i32) {
    %c0_i32 = arith.constant 0 : i32
    %c0_i32_0 = arith.constant 0 : i32
    return %arg0, %c0_i32, %arg1 : i32, i32, i32
  }
  func.func @transform_3(%arg0: i32, %arg1: i32) -> (i32, i32) {
    %c0_i32 = arith.constant 0 : i32
    %c0_i32_0 = arith.constant 0 : i32
    %c0_i32_1 = arith.constant 0 : i32
    return %c0_i32, %c0_i32_0 : i32, i32
  }
  func.func @transform_4(%arg0: i32, %arg1: i32) -> (i32, i32) {
    %c0_i32 = arith.constant 0 : i32
    %c0_i32_0 = arith.constant 0 : i32
    %c0_i32_1 = arith.constant 0 : i32
    return %c0_i32, %c0_i32_0 : i32, i32
  }
  func.func @transform_5(%arg0: i32, %arg1: i32) -> (i32, i32) {
    %c0_i32 = arith.constant 0 : i32
    %c0_i32_0 = arith.constant 0 : i32
    %c0_i32_1 = arith.constant 0 : i32
    return %c0_i32, %c0_i32_0 : i32, i32
  }
  func.func @transform_6(%arg0: i32, %arg1: i32) -> (i32, i32, i32) {
    %c0_i32 = arith.constant 0 : i32
    %c0_i32_0 = arith.constant 0 : i32
    %c0_i32_1 = arith.constant 0 : i32
    return %arg0, %c0_i32, %c0_i32_0 : i32, i32, i32
  }
}

</mosaic_0001>

<llo_original>
// kernel: tpu_custom_call.1
$region0: #{tpu_custom_call.1}
  #allocation0 [shape = 'u32[]', space=smem, size = 0x4, offset = 0x4, fixed_abs, tag = 'smem constant byte address 0x4 - core index']
  #allocation1 [shape = 'u32[144,128]{1,0:T(1,128)}', space=vmem, size = 0x12000, scoped, tag = 'internal scratch']
  %s0 = inlined_call_operand.vmem [shape: f32[2,3], index: 0, kind: input, shape index: {}]
  %s1 = inlined_call_operand.hbm [shape: f32[2,4,256], index: 1, kind: input, shape index: {}]
  %s2 = inlined_call_operand.hbm [shape: f32[2,4,256], index: 2, kind: input, shape index: {}]
  %s3 = inlined_call_operand.vmem [shape: f32[4,4], index: 3, kind: input, shape index: {}]
  %s4 = inlined_call_operand.vmem [shape: f32[4,1], index: 4, kind: input, shape index: {}]
  %s5 = inlined_call_operand.vmem [shape: f32[4,1], index: 5, kind: input, shape index: {}]
  %s6 = inlined_call_operand.hbm [shape: f32[2,8,128], index: 6, kind: output, shape index: {}]
  %s7 = sld [smem:[#allocation0]]
  $region73: #{tpu_custom_call.1} parent=0
    _
  %s9 = ssub.s32 1, %s7
  %s10 = scalar_select 0, %s9, %s7
  $region1: #{tpu_custom_call.1} parent=0
    #allocation2 [shape = 'u8[1024]{0}', space=smem, size = 0x400, scoped, tag = 'input window, operand 0, single buffered']
    #allocation3 [shape = 's32[2]{0}', space=sflag, size = 0x8, scoped, tag = 'scoped memory for tpu_custom_call.1']
    #allocation4 [shape = 's32[2]{0}', space=sflag, size = 0x8, scoped, tag = 'scoped memory for tpu_custom_call.1']
    #allocation5 [shape = 's32[2]{0}', space=sflag, size = 0x8, scoped, tag = 'scoped memory for tpu_custom_call.1']
    #allocation6 [shape = 'u8[8192]{0}', space=vmem, size = 0x2000, scoped, tag = 'input window, operand 1']
    #allocation7 [shape = 'u8[8192]{0}', space=vmem, size = 0x2000, scoped, tag = 'input window, operand 2']
    #allocation8 [shape = 's32[2]{0}', space=sflag, size = 0x8, scoped, tag = 'scoped memory for tpu_custom_call.1']
    #allocation9 [shape = 'u8[8192]{0}', space=vmem, size = 0x2000, scoped, tag = 'output window, operand 0']
    %11 = vsyncpa [#allocation5], 0
    %12 = vsyncpa [#allocation3], 0
    %s13 = scalar_lea.sflag [#allocation3], 1
    %14 = vsyncpa %s13, 0
    %15 = vsyncpa [#allocation8], 0
    %s16 = scalar_lea.sflag [#allocation8], 1
    %17 = vsyncpa %s16, 0
    %18 = vsyncpa [#allocation4], 0
    %s19 = scalar_lea.sflag [#allocation4], 1
    %20 = vsyncpa %s19, 0
    loop: start=0, step=1, limit=4
    $region2: #{tpu_custom_call.1} parent=1 // loop_pre_header
      _
    $region3: #{tpu_custom_call.1} parent=1 // loop_header
      %s22 = sphi 0, %s26
      %p23 = scmp.ge.s32.totalorder %s22, 4
      %s29 = sphi 0, %s41
      %s30 = sphi 0, %s37
      %s31 = sphi 0, %s29
      %s32 = sphi 0, %s30
      %s33 = sphi 0, %s31
      %s34 = sphi 0, %s32
      %s42 = sphi 0, %s42
      %s44 = sphi 0, %s42
      %s45 = sphi 0, %s44
      %s59 = sphi 0, %s45
      %s67 = sphi 0, %s69
      %s70 = sphi 0, %s67
      %s71 = sphi 0, %s70
      %s87 = sphi 0, %s71
      %s95 = sphi 0, %s97
      %s98 = sphi 0, %s95
      %s99 = sphi 0, %s98
      %s115 = sphi 0, %s99
      %s119 = sphi 0, %s119
      %s121 = sphi 0, %s119
      %s122 = sphi 0, %s121
      %s136 = sphi 0, %s122
      %s140 = sphi 0, %s140
      %s142 = sphi 0, %s140
      %s143 = sphi 0, %s142
      %s157 = sphi 0, %s143
      %s161 = sphi 0, %s161
      %s163 = sphi 0, %s161
      %s164 = sphi 0, %s163
      %s178 = sphi 0, %s164
      %s184 = sphi 0, %s186
      %s187 = sphi 0, %s184
      %s188 = sphi 0, %s187
      %s204 = sphi 0, %s188
    $region4: #{tpu_custom_call.1} parent=1 // loop_header_branch
      %25 = sbr.rel (%p23) target = $region8
    $region5: #{tpu_custom_call.1} parent=1 // loop_body
      %s27 = ssub.s32 %s22, 1
      %s28 = ssub.s32 %s22, 2
      %s35 = sadd.s32 1, %s30
      %p36 = scmp.ge.s32.totalorder %s35, 1
      %s37 = scalar_select %p36, 0, %s35
      %s38 = sadd.s32 1, %s29
      %s39 = scalar_select %p36, %s38, %s29
      %p40 = scmp.ge.s32.totalorder %s39, 2
      %s41 = scalar_select %p40, 0, %s39
      %s43 = sadd.s32 %s42, 1
      %p46 = scmp.eq.s32.totalorder %s22, 1
      %p47 = scmp.ne.s32.totalorder %s42, %s44
      %p48 = scmp.eq.s32.totalorder %s22, 0
      %p49 = por %p47, %p48
      %p50 = scmp.ne.s32.totalorder %s42, %s44
      %p51 = scmp.eq.s32.totalorder %s27, 1
      %p52 = por %p50, %p51
      %p53 = scmp.ne.s32.totalorder %s44, %s45
      %p54 = scmp.eq.s32.totalorder %s27, 0
      %p55 = por %p53, %p54
      %p56 = scmp.ne.s32.totalorder %s44, %s45
      %p57 = scmp.eq.s32.totalorder %s28, 1
      %p58 = por %p56, %p57
      %p60 = scmp.ne.s32.totalorder %s45, %s59
      %p61 = scmp.eq.s32.totalorder %s28, 0
      %p62 = por %p60, %p61
      %s63 = ssub.s32 %s29, %s41
      %s64 = ssub.s32 %s30, %s37
      %s65 = sor.u32 %s63, %s64
      %p66 = scmp.eq.s32.totalorder %s65, 0
      %s68 = sadd.s32 %s67, 1
      %s69 = scalar_select %p66, %s67, %s68
      %p72 = pneg %p66
      %p73 = scmp.eq.s32.totalorder %s22, 1
      %p74 = por %p72, %p73
      %p75 = scmp.ne.s32.totalorder %s67, %s70
      %p76 = scmp.eq.s32.totalorder %s22, 0
      %p77 = por %p75, %p76
      %p78 = scmp.ne.s32.totalorder %s67, %s70
      %p79 = scmp.eq.s32.totalorder %s27, 1
      %p80 = por %p78, %p79
      %p81 = scmp.ne.s32.totalorder %s70, %s71
      %p82 = scmp.eq.s32.totalorder %s27, 0
      %p83 = por %p81, %p82
      %p84 = scmp.ne.s32.totalorder %s70, %s71
      %p85 = scmp.eq.s32.totalorder %s28, 1
      %p86 = por %p84, %p85
      %p88 = scmp.ne.s32.totalorder %s71, %s87
      %p89 = scmp.eq.s32.totalorder %s28, 0
      %p90 = por %p88, %p89
      %s91 = ssub.s32 %s29, %s41
      %s92 = ssub.s32 %s30, %s37
      %s93 = sor.u32 %s91, %s92
      %p94 = scmp.eq.s32.totalorder %s93, 0
      %s96 = sadd.s32 %s95, 1
      %s97 = scalar_select %p94, %s95, %s96
      %p100 = pneg %p94
      %p101 = scmp.eq.s32.totalorder %s22, 1
      %p102 = por %p100, %p101
      %p103 = scmp.ne.s32.totalorder %s95, %s98
      %p104 = scmp.eq.s32.totalorder %s22, 0
      %p105 = por %p103, %p104
      %p106 = scmp.ne.s32.totalorder %s95, %s98
      %p107 = scmp.eq.s32.totalorder %s27, 1
      %p108 = por %p106, %p107
      %p109 = scmp.ne.s32.totalorder %s98, %s99
      %p110 = scmp.eq.s32.totalorder %s27, 0
      %p111 = por %p109, %p110
      %p112 = scmp.ne.s32.totalorder %s98, %s99
      %p113 = scmp.eq.s32.totalorder %s28, 1
      %p114 = por %p112, %p113
      %p116 = scmp.ne.s32.totalorder %s99, %s115
      %p117 = scmp.eq.s32.totalorder %s28, 0
      %p118 = por %p116, %p117
      %s120 = sadd.s32 %s119, 1
      %p123 = scmp.eq.s32.totalorder %s22, 1
      %p124 = scmp.ne.s32.totalorder %s119, %s121
      %p125 = scmp.eq.s32.totalorder %s22, 0
      %p126 = por %p124, %p125
      %p127 = scmp.ne.s32.totalorder %s119, %s121
      %p128 = scmp.eq.s32.totalorder %s27, 1
      %p129 = por %p127, %p128
      %p130 = scmp.ne.s32.totalorder %s121, %s122
      %p131 = scmp.eq.s32.totalorder %s27, 0
      %p132 = por %p130, %p131
      %p133 = scmp.ne.s32.totalorder %s121, %s122
      %p134 = scmp.eq.s32.totalorder %s28, 1
      %p135 = por %p133, %p134
      %p137 = scmp.ne.s32.totalorder %s122, %s136
      %p138 = scmp.eq.s32.totalorder %s28, 0
      %p139 = por %p137, %p138
      %s141 = sadd.s32 %s140, 1
      %p144 = scmp.eq.s32.totalorder %s22, 1
      %p145 = scmp.ne.s32.totalorder %s140, %s142
      %p146 = scmp.eq.s32.totalorder %s22, 0
      %p147 = por %p145, %p146
      %p148 = scmp.ne.s32.totalorder %s140, %s142
      %p149 = scmp.eq.s32.totalorder %s27, 1
      %p150 = por %p148, %p149
      %p151 = scmp.ne.s32.totalorder %s142, %s143
      %p152 = scmp.eq.s32.totalorder %s27, 0
      %p153 = por %p151, %p152
      %p154 = scmp.ne.s32.totalorder %s142, %s143
      %p155 = scmp.eq.s32.totalorder %s28, 1
      %p156 = por %p154, %p155
      %p158 = scmp.ne.s32.totalorder %s143, %s157
      %p159 = scmp.eq.s32.totalorder %s28, 0
      %p160 = por %p158, %p159
      %s162 = sadd.s32 %s161, 1
      %p165 = scmp.eq.s32.totalorder %s22, 1
      %p166 = scmp.ne.s32.totalorder %s161, %s163
      %p167 = scmp.eq.s32.totalorder %s22, 0
      %p168 = por %p166, %p167
      %p169 = scmp.ne.s32.totalorder %s161, %s163
      %p170 = scmp.eq.s32.totalorder %s27, 1
      %p171 = por %p169, %p170
      %p172 = scmp.ne.s32.totalorder %s163, %s164
      %p173 = scmp.eq.s32.totalorder %s27, 0
      %p174 = por %p172, %p173
      %p175 = scmp.ne.s32.totalorder %s163, %s164
      %p176 = scmp.eq.s32.totalorder %s28, 1
      %p177 = por %p175, %p176
      %p179 = scmp.ne.s32.totalorder %s164, %s178
      %p180 = scmp.eq.s32.totalorder %s28, 0
      %p181 = por %p179, %p180
      %s182 = ssub.s32 %s29, %s41
      %p183 = scmp.eq.s32.totalorder %s182, 0
      %s185 = sadd.s32 %s184, 1
      %s186 = scalar_select %p183, %s184, %s185
      %p189 = pneg %p183
      %p190 = scmp.eq.s32.totalorder %s22, 1
      %p191 = por %p189, %p190
      %p192 = scmp.ne.s32.totalorder %s184, %s187
      %p193 = scmp.eq.s32.totalorder %s22, 0
      %p194 = por %p192, %p193
      %p195 = scmp.ne.s32.totalorder %s184, %s187
      %p196 = scmp.eq.s32.totalorder %s27, 1
      %p197 = por %p195, %p196
      %p198 = scmp.ne.s32.totalorder %s187, %s188
      %p199 = scmp.eq.s32.totalorder %s27, 0
      %p200 = por %p198, %p199
      %p201 = scmp.ne.s32.totalorder %s187, %s188
      %p202 = scmp.eq.s32.totalorder %s28, 1
      %p203 = por %p201, %p202
      %p205 = scmp.ne.s32.totalorder %s188, %s204
      %p206 = scmp.eq.s32.totalorder %s28, 0
      %p207 = por %p205, %p206
      %p208 = scmp.le.s32.totalorder 1, %s22
      %p209 = scmp.lt.s32.totalorder %s22, 3
      %p210 = pnand %p208, %p209
      %p211 = pneg %p210
      // Predicated region
      $region9: #{tpu_custom_call.1} parent=5 // pred_check
        _
      $region10: #{tpu_custom_call.1} parent=5 // pred_check_branch
        %213 = sbr.rel (%p210) target = $region12
      $region11: #{tpu_custom_call.1} parent=5 // pred_region
        %s214 = ssub.s32 %s22, 1
        // Predicated region
        $region13: #{tpu_custom_call.1} parent=11 // pred_check
          %p215 = pneg %p55
        $region14: #{tpu_custom_call.1} parent=11 // pred_check_branch
          %217 = sbr.rel (%p215) target = $region16
        $region15: #{tpu_custom_call.1} parent=11 // pred_region
          %s219 = ssub.s32 32, 32
          %220 = vsyncadd [#allocation5], %s219
          %s222 = sshll.u32 %s0, 4
          %s223 = int_to_ptr.vmem [resolvable:$true] %s222
          %225 = dma.vmem_to_smem %s223, 32, [#allocation2], [#allocation5]
        $region16: #{tpu_custom_call.1} parent=11 // pred_fallthru
          _
        // Predicated region
        $region17: #{tpu_custom_call.1} parent=11 // pred_check
          %p226 = pneg %p132
        $region18: #{tpu_custom_call.1} parent=11 // pred_check_branch
          %228 = sbr.rel (%p226) target = $region20
        $region19: #{tpu_custom_call.1} parent=11 // pred_region
          _
        $region20: #{tpu_custom_call.1} parent=11 // pred_fallthru
          _
        // Predicated region
        $region21: #{tpu_custom_call.1} parent=11 // pred_check
          %p229 = pneg %p153
        $region22: #{tpu_custom_call.1} parent=11 // pred_check_branch
          %231 = sbr.rel (%p229) target = $region24
        $region23: #{tpu_custom_call.1} parent=11 // pred_region
          _
        $region24: #{tpu_custom_call.1} parent=11 // pred_fallthru
          _
        // Predicated region
        $region25: #{tpu_custom_call.1} parent=11 // pred_check
          %p232 = pneg %p174
        $region26: #{tpu_custom_call.1} parent=11 // pred_check_branch
          %234 = sbr.rel (%p232) target = $region28
        $region27: #{tpu_custom_call.1} parent=11 // pred_region
          _
        $region28: #{tpu_custom_call.1} parent=11 // pred_fallthru
          _
      $region12: #{tpu_custom_call.1} parent=5 // pred_fallthru
        _
      %p235 = scmp.lt.s32.totalorder %s22, 2
      // Predicated region
      $region29: #{tpu_custom_call.1} parent=5 // pred_check
        %p236 = pneg %p235
      $region30: #{tpu_custom_call.1} parent=5 // pred_check_branch
        %238 = sbr.rel (%p236) target = $region32
      $region31: #{tpu_custom_call.1} parent=5 // pred_region
        // Predicated region
        $region33: #{tpu_custom_call.1} parent=31 // pred_check
          %p239 = pneg %p77
        $region34: #{tpu_custom_call.1} parent=31 // pred_check_branch
          %241 = sbr.rel (%p239) target = $region36
        $region35: #{tpu_custom_call.1} parent=31 // pred_region
          %s242 = sand.u32 %s67, 1
          %s243 = scalar_lea.sflag [#allocation3], %s242
          %s244 = sand.u32 %s67, 1
          %s245 = smul.addr %s244, 8
          %s246 = scalar_lea.vmem [#allocation6], %s245
          %s247 = smul.u32 2, %s30
          %s249 = ssub.s32 128, 128
          %250 = vsyncadd %s243, %s249
          %s251 = smul.addr %s29, 2
          %s252 = sadd.s32 %s247, %s251
          %s253 = smul.addr %s252, 64
          %s254 = scalar_lea.hbm %s1, %s253
          %s256 = sshll.u32 %s246, 4
          %s257 = int_to_ptr.vmem [resolvable:$true] %s256
          %259 = dma.hbm_to_vmem [thread:$0]  %s254, 128, %s257, %s243
        $region36: #{tpu_custom_call.1} parent=31 // pred_fallthru
          _
        // Predicated region
        $region37: #{tpu_custom_call.1} parent=31 // pred_check
          %p260 = pneg %p105
        $region38: #{tpu_custom_call.1} parent=31 // pred_check_branch
          %262 = sbr.rel (%p260) target = $region40
        $region39: #{tpu_custom_call.1} parent=31 // pred_region
          %s263 = sand.u32 %s95, 1
          %s264 = scalar_lea.sflag [#allocation8], %s263
          %s265 = sand.u32 %s95, 1
          %s266 = smul.addr %s265, 8
          %s267 = scalar_lea.vmem [#allocation7], %s266
          %s268 = smul.u32 2, %s30
          %s270 = ssub.s32 128, 128
          %271 = vsyncadd %s264, %s270
          %s272 = smul.addr %s29, 2
          %s273 = sadd.s32 %s268, %s272
          %s274 = smul.addr %s273, 64
          %s275 = scalar_lea.hbm %s2, %s274
          %s277 = sshll.u32 %s267, 4
          %s278 = int_to_ptr.vmem [resolvable:$true] %s277
          %280 = dma.hbm_to_vmem [thread:$0]  %s275, 128, %s278, %s264
        $region40: #{tpu_custom_call.1} parent=31 // pred_fallthru
          _
      $region32: #{tpu_custom_call.1} parent=5 // pred_fallthru
        _
      %p281 = scmp.le.s32.totalorder 1, %s22
      %p282 = scmp.lt.s32.totalorder %s22, 3
      %p283 = pnand %p281, %p282
      %p284 = pneg %p283
      // Predicated region
      $region41: #{tpu_custom_call.1} parent=5 // pred_check
        _
      $region42: #{tpu_custom_call.1} parent=5 // pred_check_branch
        %286 = sbr.rel (%p283) target = $region44
      $region43: #{tpu_custom_call.1} parent=5 // pred_region
        %s287 = ssub.s32 %s22, 1
        // Predicated region
        $region45: #{tpu_custom_call.1} parent=43 // pred_check
          %p288 = pneg %p55
        $region46: #{tpu_custom_call.1} parent=43 // pred_check_branch
          %290 = sbr.rel (%p288) target = $region48
        $region47: #{tpu_custom_call.1} parent=43 // pred_region
          %291 = dma.done [#allocation5], 32
        $region48: #{tpu_custom_call.1} parent=43 // pred_fallthru
          _
        %s292 = sand.u32 %s70, 1
        %s293 = scalar_lea.sflag [#allocation3], %s292
        %s294 = sand.u32 %s70, 1
        %s295 = smul.addr %s294, 8
        %s296 = scalar_lea.vmem [#allocation6], %s295
        // Predicated region
        $region49: #{tpu_custom_call.1} parent=43 // pred_check
          %p297 = pneg %p83
        $region50: #{tpu_custom_call.1} parent=43 // pred_check_branch
          %299 = sbr.rel (%p297) target = $region52
        $region51: #{tpu_custom_call.1} parent=43 // pred_region
          %300 = dma.done %s293, 128
        $region52: #{tpu_custom_call.1} parent=43 // pred_fallthru
          _
        %s301 = sand.u32 %s98, 1
        %s302 = scalar_lea.sflag [#allocation8], %s301
        %s303 = sand.u32 %s98, 1
        %s304 = smul.addr %s303, 8
        %s305 = scalar_lea.vmem [#allocation7], %s304
        // Predicated region
        $region53: #{tpu_custom_call.1} parent=43 // pred_check
          %p306 = pneg %p111
        $region54: #{tpu_custom_call.1} parent=43 // pred_check_branch
          %308 = sbr.rel (%p306) target = $region56
        $region55: #{tpu_custom_call.1} parent=43 // pred_region
          %309 = dma.done %s302, 128
        $region56: #{tpu_custom_call.1} parent=43 // pred_fallthru
          _
        %310 = sfence
        %p311 = pneg %p55
        %p312 = pneg %p52
        %s313 = sand.u32 %s70, 1
        %s314 = scalar_lea.sflag [#allocation3], %s313
        %s315 = sand.u32 %s70, 1
        %s316 = smul.addr %s315, 8
        %s317 = scalar_lea.vmem [#allocation6], %s316
        %p318 = pneg %p83
        %p319 = pneg %p80
        %s320 = sand.u32 %s98, 1
        %s321 = scalar_lea.sflag [#allocation8], %s320
        %s322 = sand.u32 %s98, 1
        %s323 = smul.addr %s322, 8
        %s324 = scalar_lea.vmem [#allocation7], %s323
        %p325 = pneg %p111
        %p326 = pneg %p108
        %p327 = pneg %p132
        %p328 = pneg %p129
        %p329 = pneg %p153
        %p330 = pneg %p150
        %p331 = pneg %p174
        %p332 = pneg %p171
        %p333 = pneg %p200
        %p334 = pneg %p197
        %s335 = sand.u32 %s187, 1
        %s336 = scalar_lea.sflag [#allocation4], %s335
        %s337 = sand.u32 %s187, 1
        %s338 = smul.addr %s337, 8
        %s339 = scalar_lea.vmem [#allocation9], %s338
        %s340 = smul.u32 2, %s32
        %s341 = smul.u32 2, %s32
        %p342 = scmp.eq.s32.totalorder %s32, 0
        // Predicated region
        $region57: #{tpu_custom_call.1} parent=43 // pred_check
          %p343 = pneg %p342
        $region58: #{tpu_custom_call.1} parent=43 // pred_check_branch
          %345 = sbr.rel (%p343) target = $region60
        $region59: #{tpu_custom_call.1} parent=43 // pred_region
          %346 = vst [vmem:[%s339] sm:$0xff] 0.0
        $region60: #{tpu_custom_call.1} parent=43 // pred_fallthru
          _
        %s347 = smul.u32 %s31, 128
        %s348 = sld [smem:[#allocation2 + %s347]]
        %s349 = sadd.s32 %s347, 1
        %s350 = sld [smem:[#allocation2 + %s349]]
        %s351 = sadd.s32 %s347, 2
        %s352 = sld [smem:[#allocation2 + %s351]]
        %v353 = vld [vmem:[%s296] sm:$0xff]
        %v354 = vld [vmem:[%s305] sm:$0xff]
        %v355 = vstv %s348
        %v356 = vmul.f32 %v355, %v353
        %v357 = vstv %s350
        %v358 = vmul.f32 %v357, %v354
        %v359 = vadd.f32 %v356, %v358
        %v360 = vmul.f32 %v355, %v354
        %v361 = vmul.f32 %v357, %v353
        %v362 = vsub.f32 %v360, %v361
        %v363 = vld [vmem:[%s3] sm:$0xf]
        %365 = vset.pattern.permute.xlu0 0
        %366 = vperm.xlu0 %365, %v363
        %v367 = vpop.permute.xlu0 %366
        %v370 = vlaneseq
        %v371 = vshrl.u32 %v370, 7
        %v372 = vsub.s32 0, %v371
        %v373 = vrot.slane %v359, %v372
        %v374 = vlaneseq
        %v375 = vshrl.u32 %v374, 7
        %v376 = vsub.s32 4, %v375
        %v377 = vrot.slane %v359, %v376
        %v380 = vlaneseq
        %v381 = vshrl.u32 %v380, 7
        %v382 = vsub.s32 0, %v381
        %v383 = vrot.slane %v373, %v382
        %v384 = vlaneseq
        %v385 = vshrl.u32 %v384, 7
        %v386 = vsub.s32 0, %v385
        %v387 = vrot.slane %v377, %v386
        %v388 = vmul.f32 %v367, %v383
        %v389 = vmul.f32 %v367, %v387
        %390 = vset.pattern.permute.xlu0 1
        %391 = vperm.xlu0 %390, %v363
        %v392 = vpop.permute.xlu0 %391
        %v394 = vlaneseq
        %v395 = vshrl.u32 %v394, 7
        %v396 = vsub.s32 1, %v395
        %v397 = vrot.slane %v359, %v396
        %v398 = vlaneseq
        %v399 = vshrl.u32 %v398, 7
        %v400 = vsub.s32 5, %v399
        %v401 = vrot.slane %v359, %v400
        %v404 = vlaneseq
        %v405 = vshrl.u32 %v404, 7
        %v406 = vsub.s32 1, %v405
        %v407 = vrot.slane %v397, %v406
        %v408 = vlaneseq
        %v409 = vshrl.u32 %v408, 7
        %v410 = vsub.s32 1, %v409
        %v411 = vrot.slane %v401, %v410
        %v412 = vmul.f32 %v392, %v407
        %v413 = vmul.f32 %v392, %v411
        %v414 = vadd.f32 %v388, %v412
        %v415 = vadd.f32 %v389, %v413
        %416 = vset.pattern.permute.xlu0 2
        %417 = vperm.xlu0 %416, %v363
        %v418 = vpop.permute.xlu0 %417
        %v420 = vlaneseq
        %v421 = vshrl.u32 %v420, 7
        %v422 = vsub.s32 2, %v421
        %v423 = vrot.slane %v359, %v422
        %v424 = vlaneseq
        %v425 = vshrl.u32 %v424, 7
        %v426 = vsub.s32 6, %v425
        %v427 = vrot.slane %v359, %v426
        %v430 = vlaneseq
        %v431 = vshrl.u32 %v430, 7
        %v432 = vsub.s32 2, %v431
        %v433 = vrot.slane %v423, %v432
        %v434 = vlaneseq
        %v435 = vshrl.u32 %v434, 7
        %v436 = vsub.s32 2, %v435
        %v437 = vrot.slane %v427, %v436
        %v438 = vmul.f32 %v418, %v433
        %v439 = vmul.f32 %v418, %v437
        %v440 = vadd.f32 %v414, %v438
        %v441 = vadd.f32 %v415, %v439
        %442 = vset.pattern.permute.xlu0 3
        %443 = vperm.xlu0 %442, %v363
        %v444 = vpop.permute.xlu0 %443
        %v446 = vlaneseq
        %v447 = vshrl.u32 %v446, 7
        %v448 = vsub.s32 3, %v447
        %v449 = vrot.slane %v359, %v448
        %v450 = vlaneseq
        %v451 = vshrl.u32 %v450, 7
        %v452 = vsub.s32 7, %v451
        %v453 = vrot.slane %v359, %v452
        %v456 = vlaneseq
        %v457 = vshrl.u32 %v456, 7
        %v458 = vsub.s32 3, %v457
        %v459 = vrot.slane %v449, %v458
        %v460 = vlaneseq
        %v461 = vshrl.u32 %v460, 7
        %v462 = vsub.s32 3, %v461
        %v463 = vrot.slane %v453, %v462
        %v464 = vmul.f32 %v444, %v459
        %v465 = vmul.f32 %v444, %v463
        %v466 = vadd.f32 %v440, %v464
        %v467 = vadd.f32 %v441, %v465
        %v468 = vld [vmem:[%s4] sm:$0xf]
        %470 = vset.pattern.permute.xlu0 0
        %471 = vperm.xlu0 %470, %v468
        %v472 = vpop.permute.xlu0 %471
        %v474 = vadd.f32 %v466, %v472
        %v475 = vadd.f32 %v467, %v472
        %v476 = vld [vmem:[%s5] sm:$0xf]
        %v477 = vstv %s352
        %v478 = vmul.f32 %v477, %v476
        %480 = vset.pattern.permute.xlu0 0
        %481 = vperm.xlu0 %480, %v478
        %v482 = vpop.permute.xlu0 %481
        %v484 = vadd.f32 %v474, %v482
        %v485 = vadd.f32 %v475, %v482
        %v487 = vcombine.high %v362, %v362
        %v489 = vsub.f32 %v484, %v362
        %v490 = vsub.f32 %v485, %v487
        %v491 = vmul.f32 %v489, %v489
        %v492 = vmul.f32 %v490, %v490
        %v493 = vadd.f32 %v491, %v492
        %v494 = vld [vmem:[%s339] sm:$0xf]
        %v495 = vadd.f32 %v494, %v493
        %496 = vst [vmem:[%s339] sm:$0xf] %v495
        %s497 = sand.u32 %s187, 1
        %s498 = scalar_lea.sflag [#allocation4], %s497
        %s499 = sand.u32 %s187, 1
        %s500 = smul.addr %s499, 8
        %s501 = scalar_lea.vmem [#allocation9], %s500
        // Predicated region
        $region61: #{tpu_custom_call.1} parent=43 // pred_check
          %p502 = pneg %p197
        $region62: #{tpu_custom_call.1} parent=43 // pred_check_branch
          %504 = sbr.rel (%p502) target = $region64
        $region63: #{tpu_custom_call.1} parent=43 // pred_region
          %s506 = ssub.s32 128, 128
          %507 = vsyncadd %s498, %s506
          %s508 = smul.addr %s31, 128
          %s509 = scalar_lea.hbm %s6, %s508
          %s511 = sshll.u32 %s501, 4
          %s512 = int_to_ptr.vmem [resolvable:$true] %s511
          %514 = dma.vmem_to_hbm [thread:$0]  %s512, 128, %s509, %s498
        $region64: #{tpu_custom_call.1} parent=43 // pred_fallthru
          _
      $region44: #{tpu_custom_call.1} parent=5 // pred_fallthru
        _
      %p515 = scmp.le.s32.totalorder 2, %s22
      // Predicated region
      $region65: #{tpu_custom_call.1} parent=5 // pred_check
        %p516 = pneg %p515
      $region66: #{tpu_custom_call.1} parent=5 // pred_check_branch
        %518 = sbr.rel (%p516) target = $region68
      $region67: #{tpu_custom_call.1} parent=5 // pred_region
        %s519 = ssub.s32 %s22, 2
        // Predicated region
        $region69: #{tpu_custom_call.1} parent=67 // pred_check
          %p520 = pneg %p203
        $region70: #{tpu_custom_call.1} parent=67 // pred_check_branch
          %522 = sbr.rel (%p520) target = $region72
        $region71: #{tpu_custom_call.1} parent=67 // pred_region
          %s523 = sand.u32 %s188, 1
          %s524 = scalar_lea.sflag [#allocation4], %s523
          %s525 = sand.u32 %s188, 1
          %s526 = smul.addr %s525, 8
          %s527 = scalar_lea.vmem [#allocation9], %s526
          %528 = dma.done %s524, 128
        $region72: #{tpu_custom_call.1} parent=67 // pred_fallthru
          _
      $region68: #{tpu_custom_call.1} parent=5 // pred_fallthru
        _
    $region6: #{tpu_custom_call.1} parent=1 // loop_footer
      %s26 = sadd.s32 1, %s22
    $region7: #{tpu_custom_call.1} parent=1 // loop_footer_branch
      %21 = sbr.rel target = $region3
    $region8: #{tpu_custom_call.1} parent=1 // loop_exit
      _
    %529 = vsyncpa [#allocation3], 1
    %s530 = scalar_lea.sflag [#allocation3], 1
    %531 = vsyncpa %s530, 1
    %532 = vsyncpa [#allocation8], 1
    %s533 = scalar_lea.sflag [#allocation8], 1
    %534 = vsyncpa %s533, 1
    %535 = vsyncpa [#allocation4], 1
    %s536 = scalar_lea.sflag [#allocation4], 1
    %537 = vsyncpa %s536, 1
    %538 = vsyncpa [#allocation5], 1
    %s539 = scalar_lea.sflag [#allocation5], 1
    %540 = vsyncpa %s539, 1

</llo_original>
